<compile_context>
chip_gen: v7x
topology: tpu7x:2x2x1
jax: 0.10.0
libtpu: 0.0.40
codegen_flags: <defaults>
</compile_context>

<pallas_src>
import numpy as np
import jax
import jax.numpy as jnp
from jax.experimental import pallas as pl
from jax.experimental.pallas import tpu as pltpu

EPS = 1e-5  # InstanceNorm2d default eps


def _round_up(x, m):
    return ((x + m - 1) // m) * m


def _chip_info():
    """(tensorcores_per_chip, vmem_bytes_per_core). device_kind heuristic only;
    a wrong guess changes grid-step count / VMEM headroom, never correctness."""
    n_tc, vmem_cap = 1, 128 * 1024 * 1024            # v5e / v6e: 1 TC, 128 MiB
    try:
        kind = jax.devices()[0].device_kind.lower()
    except Exception:
        return n_tc, vmem_cap
    if "7" in kind:                                   # v7x: 2 TCs, 64 MiB per TC
        n_tc, vmem_cap = 2, 64 * 1024 * 1024
    return n_tc, vmem_cap


def conv_forward(x, weight, bias=None):
    """Forward pass of `conv` (inference semantics).

    x: (N, C_in, H, W) f32, weight: (C_out, C_in, 3, 3), bias: (C_out,).
    `bias` is accepted for API parity but unused: InstanceNorm2d (affine=False)
    subtracts the per-(sample, channel) mean, cancelling per-channel constants.
    """
    del bias
    N, C_in, H, W = x.shape
    C_out = weight.shape[0]
    assert H % 2 == 0 and W % 2 == 0

    Hp, Wp = H + 2, W + 2                      # zero-padded spatial dims
    Ho, Wo = H // 2, W // 2
    HW, HWo = H * W, Ho * Wo
    shifts = tuple(ky * Wp + kx for ky in range(3) for kx in range(3))
    L_blk = _round_up(H * Wp, 128)             # per-sample conv-output lane window
    Lp = _round_up(shifts[-1] + L_blk, 128)    # padded flat sample length
    inv_hw = 1.0 / float(HW)

    n_tc, vmem_cap = _chip_info()

    def _vmem_bytes(bt):
        # double-buffered pipeline blocks + single-buffered in-kernel temporaries
        g = bt * L_blk - (Wp + 1)
        lanes_out = _round_up(bt * HWo, 128)
        blocks = (2 * bt * C_in * Lp * 2                       # x tile (bf16)
                  + 2 * C_out * 9 * C_in * 2                   # fused weight
                  + 2 * 8 * L_blk * 4                          # mask
                  + 2 * _round_up(g, 16) * lanes_out * 2       # selector (bf16)
                  + 2 * C_out * lanes_out * 4)                 # output tile
        temps = (9 * C_in * bt * L_blk * 2                     # stacked GEMM RHS
                 + 3 * C_out * bt * L_blk * 4)                 # acc / y / pooled
        return blocks + temps

    def _pick_batch_tile():
        budget = vmem_cap // 2                 # leave headroom for compiler scratch
        if n_tc > 1 and N >= 2:
            # v7x: keep an even number of >= 2 grid steps so both TCs get work
            cands = [bt for bt in range(N, 0, -1)
                     if N % bt == 0 and (N // bt) % n_tc == 0]
        else:
            # v5e / v6e: single TensorCore -> one grid step unless VMEM says no
            cands = [bt for bt in range(N, 0, -1) if N % bt == 0]
        for bt in cands:
            if _vmem_bytes(bt) <= budget:
                return bt
        return 1

    bt = _pick_batch_tile()
    G = bt * L_blk - (Wp + 1)                  # length of the shifted pooling views

    # --- glue (plain JAX): zero-pad, flatten spatial, bf16 GEMM operands ---
    xp = jnp.pad(x, ((0, 0), (0, 0), (1, 1), (1, 1))).reshape(N, C_in, Hp * Wp)
    xp = jnp.pad(xp, ((0, 0), (0, 0), (0, Lp - Hp * Wp))).astype(jnp.bfloat16)
    # fused-K weight: K index = (ky*3 + kx)*C_in + c_in, matching the RHS stack
    w9 = jnp.transpose(weight, (0, 2, 3, 1)).reshape(C_out, 9 * C_in)
    w9 = w9.astype(jnp.bfloat16)

    # --- tiny constants ---
    # validity mask over one sample window (kills pad columns / tail junk in stats)
    pidx = np.arange(L_blk)
    mask_np = ((pidx < H * Wp) & (pidx % Wp < W)).astype(np.float32).reshape(1, L_blk)
    # one-hot compactor gathering the (2h', 2w') pooled positions of all bt
    # samples at once; exact in bf16 -> single fast MXU pass, lane-dense output.
    sel_np = np.zeros((G, bt * HWo), np.float32)
    for b in range(bt):
        for hh in range(Ho):
            for ww in range(Wo):
                sel_np[b * L_blk + (2 * hh) * Wp + 2 * ww,
                       b * HWo + hh * Wo + ww] = 1.0
    mask = jnp.asarray(mask_np)
    sel = jnp.asarray(sel_np, dtype=jnp.bfloat16)

    def kernel(x_ref, w_ref, mask_ref, sel_ref, out_ref):
        msk = mask_ref[...]                        # (1, L_blk) f32
        xv = x_ref[...]                            # (bt, C_in, Lp) bf16, read once

        # Conv2d(3x3, stride 1, pad 1) as ONE fused-K GEMM: stack the 9
        # statically shifted lane slices of every sample of the tile into a
        # (9*C_in, bt*L_blk) bf16 operand and hit the MXU once (f32 accumulate).
        taps = []
        for s in shifts:                           # static, 9 taps
            taps.append(jnp.concatenate(
                [xv[b, :, s:s + L_blk] for b in range(bt)], axis=-1))
        rhs = jnp.concatenate(taps, axis=0)        # (9*C_in, bt*L_blk) bf16
        acc = jnp.dot(w_ref[...], rhs,
                      preferred_element_type=jnp.float32)   # (C_out, bt*L_blk) f32

        # InstanceNorm2d (affine=False, biased variance, eps=1e-5): single-pass
        # per-sample statistics over lane-aligned 128-multiple windows, + ReLU.
        ys = []
        for b in range(bt):                        # static, bt is small
            a = acc[:, b * L_blk:(b + 1) * L_blk]  # (C_out, L_blk), lane-aligned
            am = a * msk
            mean = jnp.sum(am, axis=-1, keepdims=True) * inv_hw
            ex2 = jnp.sum(am * a, axis=-1, keepdims=True) * inv_hw
            var = jnp.maximum(ex2 - mean * mean, 0.0)
            yb = (a - mean) * jax.lax.rsqrt(var + EPS)
            ys.append(jnp.maximum(yb, 0.0))
        y = jnp.concatenate(ys, axis=-1)           # (C_out, bt*L_blk) f32

        # MaxPool2d(2): elementwise max of 4 shifted views (pure VPU work), then
        # compact every sample's (2h', 2w') positions with ONE bf16 MXU matmul
        # producing a lane-dense (C_out, bt*HWo) tile.
        m = y[:, 0:G]
        for d in (1, Wp, Wp + 1):
            m = jnp.maximum(m, y[:, d:d + G])
        res = jnp.dot(m.astype(jnp.bfloat16), sel_ref[...],
                      preferred_element_type=jnp.float32)
        out_ref[0] = res.astype(out_ref.dtype)

    vmem_limit = int(min(vmem_cap, max(8 * 1024 * 1024, 2 * _vmem_bytes(bt))))

    out = pl.pallas_call(
        kernel,
        out_shape=jax.ShapeDtypeStruct((N // bt, C_out, bt * HWo), jnp.float32),
        grid=(N // bt,),
        in_specs=[
            pl.BlockSpec((bt, C_in, Lp), lambda n: (n, 0, 0)),
            pl.BlockSpec((C_out, 9 * C_in), lambda n: (0, 0)),
            pl.BlockSpec((1, L_blk), lambda n: (0, 0)),
            pl.BlockSpec((G, bt * HWo), lambda n: (0, 0)),
        ],
        out_specs=pl.BlockSpec((1, C_out, bt * HWo), lambda n: (n, 0, 0)),
        compiler_params=pltpu.CompilerParams(
            dimension_semantics=("parallel",),
            vmem_limit_bytes=vmem_limit,
        ),
    )(xp, w9, mask, sel)

    # un-interleave the lane-packed batch tile back to (N, C_out, Ho, Wo)
    out = out.reshape(N // bt, C_out, bt, HWo).transpose(0, 2, 1, 3)
    # TODO(synk): nn.Dropout(0.2) is identity at inference; training-mode RNG
    # masking (pltpu.prng_seed / prng_random_bits) is omitted.
    return out.reshape(N, C_out, Ho, Wo)


def _reference(x, weight, bias):
    """Pure-JAX reference with the same (inference) semantics as the PyTorch module."""
    y = jax.lax.conv_general_dilated(
        x, weight, window_strides=(1, 1), padding=((1, 1), (1, 1)),
        dimension_numbers=("NCHW", "OIHW", "NCHW"))
    y = y + bias[None, :, None, None]
    mean = y.mean(axis=(2, 3), keepdims=True)
    var = ((y - mean) ** 2).mean(axis=(2, 3), keepdims=True)
    y = (y - mean) * jax.lax.rsqrt(var + EPS)
    y = jnp.maximum(y, 0.0)
    N, C, H, W = y.shape
    y = y.reshape(N, C, H // 2, 2, W // 2, 2).max(axis=(3, 5))
    return y  # Dropout(0.2) is identity at inference


if __name__ == "__main__":
    key = jax.random.PRNGKey(0)
    kx, kw, kb = jax.random.split(key, 3)

    N, C_in, C_out, H, W = 2, 4, 8, 16, 16
    x = jax.random.normal(kx, (N, C_in, H, W), jnp.float32)

    # Deterministic Conv2d-style init (kaiming-uniform bound = 1/sqrt(fan_in))
    fan_in = C_in * 3 * 3
    bound = 1.0 / np.sqrt(fan_in)
    weight = jax.random.uniform(kw, (C_out, C_in, 3, 3), jnp.float32, -bound, bound)
    bias = jax.random.uniform(kb, (C_out,), jnp.float32, -bound, bound)

    out = conv_forward(x, weight, bias)
    out = jax.block_until_ready(out)

    # The reference sees the same bf16-quantized conv GEMM operands the kernel
    # uses; accumulation / normalization are f32 on both sides. The kernel
    # additionally rounds the normalized activations to bf16 for the pooling
    # compaction GEMM (documented precision choice), hence rtol covers half a
    # bf16 ulp (~2e-3 relative) with margin.
    xq = x.astype(jnp.bfloat16).astype(jnp.float32)
    wq = weight.astype(jnp.bfloat16).astype(jnp.float32)
    ref = _reference(xq, wq, bias)

    np.testing.assert_allclose(np.asarray(out), np.asarray(ref), rtol=5e-3, atol=2e-3)
    assert out.shape == (N, C_out, H // 2, W // 2)
    print("KERNEL_OK")
</pallas_src>

<mosaic_0001>
module attributes {stable_mosaic.version = 11 : i64} {
  func.func @kernel(%arg0: i32, %arg1: memref<2x4x512xbf16, #tpu.memory_space<vmem>>, %arg2: memref<8x36xbf16, #tpu.memory_space<vmem>>, %arg3: memref<1x384xf32, #tpu.memory_space<vmem>>, %arg4: memref<749x128xbf16, #tpu.memory_space<vmem>>, %arg5: memref<1x8x128xf32, #tpu.memory_space<vmem>>) attributes {dimension_semantics = [#tpu.dimension_semantics<parallel>], iteration_bounds = array<i64: 1>, scalar_prefetch = 0 : i64, scratch_operands = 0 : i64, tpu.core_type = #tpu.core_type<tc>, window_params = [{transform_indices = @transform_0, window_bounds = array<i64: 2, 4, 512>}, {pipeline_mode = #tpu.pipeline_mode<synchronous>, transform_indices = @transform_1, window_bounds = array<i64: 8, 36>}, {pipeline_mode = #tpu.pipeline_mode<synchronous>, transform_indices = @transform_2, window_bounds = array<i64: 1, 384>}, {pipeline_mode = #tpu.pipeline_mode<synchronous>, transform_indices = @transform_3, window_bounds = array<i64: 749, 128>}, {transform_indices = @transform_4, window_bounds = array<i64: 1, 8, 128>}]} {
    %c0 = arith.constant 0 : index
    %c0_0 = arith.constant 0 : index
    %0 = vector.load %arg3[%c0, %c0_0] : memref<1x384xf32, #tpu.memory_space<vmem>>, vector<1x384xf32>
    %c0_1 = arith.constant 0 : index
    %c0_2 = arith.constant 0 : index
    %c0_3 = arith.constant 0 : index
    %1 = vector.load %arg1[%c0_1, %c0_2, %c0_3] : memref<2x4x512xbf16, #tpu.memory_space<vmem>>, vector<2x4x512xbf16>
    %2 = vector.extract_strided_slice %1 {offsets = [0, 0, 0], sizes = [1, 4, 384], strides = [1, 1, 1]} : vector<2x4x512xbf16> to vector<1x4x384xbf16>
    %3 = vector.shape_cast %2 : vector<1x4x384xbf16> to vector<4x384xbf16>
    %4 = vector.extract_strided_slice %1 {offsets = [1, 0, 0], sizes = [1, 4, 384], strides = [1, 1, 1]} : vector<2x4x512xbf16> to vector<1x4x384xbf16>
    %5 = vector.shape_cast %4 : vector<1x4x384xbf16> to vector<4x384xbf16>
    %6 = tpu.concatenate %3, %5 in 1 : vector<4x384xbf16>, vector<4x384xbf16> -> vector<4x768xbf16>
    %7 = vector.extract_strided_slice %1 {offsets = [0, 0, 1], sizes = [1, 4, 384], strides = [1, 1, 1]} : vector<2x4x512xbf16> to vector<1x4x384xbf16>
    %8 = vector.shape_cast %7 : vector<1x4x384xbf16> to vector<4x384xbf16>
    %9 = vector.extract_strided_slice %1 {offsets = [1, 0, 1], sizes = [1, 4, 384], strides = [1, 1, 1]} : vector<2x4x512xbf16> to vector<1x4x384xbf16>
    %10 = vector.shape_cast %9 : vector<1x4x384xbf16> to vector<4x384xbf16>
    %11 = tpu.concatenate %8, %10 in 1 : vector<4x384xbf16>, vector<4x384xbf16> -> vector<4x768xbf16>
    %12 = vector.extract_strided_slice %1 {offsets = [0, 0, 2], sizes = [1, 4, 384], strides = [1, 1, 1]} : vector<2x4x512xbf16> to vector<1x4x384xbf16>
    %13 = vector.shape_cast %12 : vector<1x4x384xbf16> to vector<4x384xbf16>
    %14 = vector.extract_strided_slice %1 {offsets = [1, 0, 2], sizes = [1, 4, 384], strides = [1, 1, 1]} : vector<2x4x512xbf16> to vector<1x4x384xbf16>
    %15 = vector.shape_cast %14 : vector<1x4x384xbf16> to vector<4x384xbf16>
    %16 = tpu.concatenate %13, %15 in 1 : vector<4x384xbf16>, vector<4x384xbf16> -> vector<4x768xbf16>
    %17 = vector.extract_strided_slice %1 {offsets = [0, 0, 18], sizes = [1, 4, 384], strides = [1, 1, 1]} : vector<2x4x512xbf16> to vector<1x4x384xbf16>
    %18 = vector.shape_cast %17 : vector<1x4x384xbf16> to vector<4x384xbf16>
    %19 = vector.extract_strided_slice %1 {offsets = [1, 0, 18], sizes = [1, 4, 384], strides = [1, 1, 1]} : vector<2x4x512xbf16> to vector<1x4x384xbf16>
    %20 = vector.shape_cast %19 : vector<1x4x384xbf16> to vector<4x384xbf16>
    %21 = tpu.concatenate %18, %20 in 1 : vector<4x384xbf16>, vector<4x384xbf16> -> vector<4x768xbf16>
    %22 = vector.extract_strided_slice %1 {offsets = [0, 0, 19], sizes = [1, 4, 384], strides = [1, 1, 1]} : vector<2x4x512xbf16> to vector<1x4x384xbf16>
    %23 = vector.shape_cast %22 : vector<1x4x384xbf16> to vector<4x384xbf16>
    %24 = vector.extract_strided_slice %1 {offsets = [1, 0, 19], sizes = [1, 4, 384], strides = [1, 1, 1]} : vector<2x4x512xbf16> to vector<1x4x384xbf16>
    %25 = vector.shape_cast %24 : vector<1x4x384xbf16> to vector<4x384xbf16>
    %26 = tpu.concatenate %23, %25 in 1 : vector<4x384xbf16>, vector<4x384xbf16> -> vector<4x768xbf16>
    %27 = vector.extract_strided_slice %1 {offsets = [0, 0, 20], sizes = [1, 4, 384], strides = [1, 1, 1]} : vector<2x4x512xbf16> to vector<1x4x384xbf16>
    %28 = vector.shape_cast %27 : vector<1x4x384xbf16> to vector<4x384xbf16>
    %29 = vector.extract_strided_slice %1 {offsets = [1, 0, 20], sizes = [1, 4, 384], strides = [1, 1, 1]} : vector<2x4x512xbf16> to vector<1x4x384xbf16>
    %30 = vector.shape_cast %29 : vector<1x4x384xbf16> to vector<4x384xbf16>
    %31 = tpu.concatenate %28, %30 in 1 : vector<4x384xbf16>, vector<4x384xbf16> -> vector<4x768xbf16>
    %32 = vector.extract_strided_slice %1 {offsets = [0, 0, 36], sizes = [1, 4, 384], strides = [1, 1, 1]} : vector<2x4x512xbf16> to vector<1x4x384xbf16>
    %33 = vector.shape_cast %32 : vector<1x4x384xbf16> to vector<4x384xbf16>
    %34 = vector.extract_strided_slice %1 {offsets = [1, 0, 36], sizes = [1, 4, 384], strides = [1, 1, 1]} : vector<2x4x512xbf16> to vector<1x4x384xbf16>
    %35 = vector.shape_cast %34 : vector<1x4x384xbf16> to vector<4x384xbf16>
    %36 = tpu.concatenate %33, %35 in 1 : vector<4x384xbf16>, vector<4x384xbf16> -> vector<4x768xbf16>
    %37 = vector.extract_strided_slice %1 {offsets = [0, 0, 37], sizes = [1, 4, 384], strides = [1, 1, 1]} : vector<2x4x512xbf16> to vector<1x4x384xbf16>
    %38 = vector.shape_cast %37 : vector<1x4x384xbf16> to vector<4x384xbf16>
    %39 = vector.extract_strided_slice %1 {offsets = [1, 0, 37], sizes = [1, 4, 384], strides = [1, 1, 1]} : vector<2x4x512xbf16> to vector<1x4x384xbf16>
    %40 = vector.shape_cast %39 : vector<1x4x384xbf16> to vector<4x384xbf16>
    %41 = tpu.concatenate %38, %40 in 1 : vector<4x384xbf16>, vector<4x384xbf16> -> vector<4x768xbf16>
    %42 = vector.extract_strided_slice %1 {offsets = [0, 0, 38], sizes = [1, 4, 384], strides = [1, 1, 1]} : vector<2x4x512xbf16> to vector<1x4x384xbf16>
    %43 = vector.shape_cast %42 : vector<1x4x384xbf16> to vector<4x384xbf16>
    %44 = vector.extract_strided_slice %1 {offsets = [1, 0, 38], sizes = [1, 4, 384], strides = [1, 1, 1]} : vector<2x4x512xbf16> to vector<1x4x384xbf16>
    %45 = vector.shape_cast %44 : vector<1x4x384xbf16> to vector<4x384xbf16>
    %46 = tpu.concatenate %43, %45 in 1 : vector<4x384xbf16>, vector<4x384xbf16> -> vector<4x768xbf16>
    %47 = tpu.concatenate %6, %11, %16, %21, %26, %31, %36, %41, %46 in 0 : vector<4x768xbf16>, vector<4x768xbf16>, vector<4x768xbf16>, vector<4x768xbf16>, vector<4x768xbf16>, vector<4x768xbf16>, vector<4x768xbf16>, vector<4x768xbf16>, vector<4x768xbf16> -> vector<36x768xbf16>
    %c0_4 = arith.constant 0 : index
    %c0_5 = arith.constant 0 : index
    %48 = vector.load %arg2[%c0_4, %c0_5] : memref<8x36xbf16, #tpu.memory_space<vmem>>, vector<8x36xbf16>
    %cst = arith.constant dense<0.000000e+00> : vector<8x768xf32>
    %49 = tpu.matmul %48, %47, %cst {dimension_numbers = #tpu.dot_dimension_numbers<[1], [0], [0], [1], [0, 0, 1, 1], [], []>} : vector<8x36xbf16>, vector<36x768xbf16>, vector<8x768xf32> -> vector<8x768xf32>
    %50 = vector.extract_strided_slice %49 {offsets = [0, 0], sizes = [8, 384], strides = [1, 1]} : vector<8x768xf32> to vector<8x384xf32>
    %51 = vector.broadcast %0 : vector<1x384xf32> to vector<8x384xf32>
    %52 = arith.mulf %50, %51 : vector<8x384xf32>
    %cst_6 = arith.constant dense<0.000000e+00> : vector<8xf32>
    %53 = vector.multi_reduction <add>, %52, %cst_6 [1] : vector<8x384xf32> to vector<8xf32>
    %54 = vector.shape_cast %53 : vector<8xf32> to vector<8x1xf32>
    %cst_7 = arith.constant 3.906250e-03 : f32
    %55 = vector.broadcast %cst_7 : f32 to vector<8x1xf32>
    %56 = arith.mulf %54, %55 : vector<8x1xf32>
    %57 = arith.mulf %52, %50 : vector<8x384xf32>
    %cst_8 = arith.constant dense<0.000000e+00> : vector<8xf32>
    %58 = vector.multi_reduction <add>, %57, %cst_8 [1] : vector<8x384xf32> to vector<8xf32>
    %59 = vector.shape_cast %58 : vector<8xf32> to vector<8x1xf32>
    %cst_9 = arith.constant 3.906250e-03 : f32
    %60 = vector.broadcast %cst_9 : f32 to vector<8x1xf32>
    %61 = arith.mulf %59, %60 : vector<8x1xf32>
    %62 = arith.mulf %56, %56 : vector<8x1xf32>
    %63 = arith.subf %61, %62 : vector<8x1xf32>
    %cst_10 = arith.constant 0.000000e+00 : f32
    %64 = vector.broadcast %cst_10 : f32 to vector<8x1xf32>
    %65 = arith.maximumf %63, %64 : vector<8x1xf32>
    %66 = vector.broadcast %56 : vector<8x1xf32> to vector<8x384xf32>
    %67 = arith.subf %50, %66 : vector<8x384xf32>
    %cst_11 = arith.constant 9.99999974E-6 : f32
    %68 = vector.broadcast %cst_11 : f32 to vector<8x1xf32>
    %69 = arith.addf %65, %68 : vector<8x1xf32>
    %70 = math.rsqrt %69 : vector<8x1xf32>
    %71 = vector.broadcast %70 : vector<8x1xf32> to vector<8x384xf32>
    %72 = arith.mulf %67, %71 : vector<8x384xf32>
    %cst_12 = arith.constant 0.000000e+00 : f32
    %73 = vector.broadcast %cst_12 : f32 to vector<8x384xf32>
    %74 = arith.maximumf %72, %73 : vector<8x384xf32>
    %75 = vector.extract_strided_slice %49 {offsets = [0, 384], sizes = [8, 384], strides = [1, 1]} : vector<8x768xf32> to vector<8x384xf32>
    %76 = vector.broadcast %0 : vector<1x384xf32> to vector<8x384xf32>
    %77 = arith.mulf %75, %76 : vector<8x384xf32>
    %cst_13 = arith.constant dense<0.000000e+00> : vector<8xf32>
    %78 = vector.multi_reduction <add>, %77, %cst_13 [1] : vector<8x384xf32> to vector<8xf32>
    %79 = vector.shape_cast %78 : vector<8xf32> to vector<8x1xf32>
    %cst_14 = arith.constant 3.906250e-03 : f32
    %80 = vector.broadcast %cst_14 : f32 to vector<8x1xf32>
    %81 = arith.mulf %79, %80 : vector<8x1xf32>
    %82 = arith.mulf %77, %75 : vector<8x384xf32>
    %cst_15 = arith.constant dense<0.000000e+00> : vector<8xf32>
    %83 = vector.multi_reduction <add>, %82, %cst_15 [1] : vector<8x384xf32> to vector<8xf32>
    %84 = vector.shape_cast %83 : vector<8xf32> to vector<8x1xf32>
    %cst_16 = arith.constant 3.906250e-03 : f32
    %85 = vector.broadcast %cst_16 : f32 to vector<8x1xf32>
    %86 = arith.mulf %84, %85 : vector<8x1xf32>
    %87 = arith.mulf %81, %81 : vector<8x1xf32>
    %88 = arith.subf %86, %87 : vector<8x1xf32>
    %cst_17 = arith.constant 0.000000e+00 : f32
    %89 = vector.broadcast %cst_17 : f32 to vector<8x1xf32>
    %90 = arith.maximumf %88, %89 : vector<8x1xf32>
    %91 = vector.broadcast %81 : vector<8x1xf32> to vector<8x384xf32>
    %92 = arith.subf %75, %91 : vector<8x384xf32>
    %cst_18 = arith.constant 9.99999974E-6 : f32
    %93 = vector.broadcast %cst_18 : f32 to vector<8x1xf32>
    %94 = arith.addf %90, %93 : vector<8x1xf32>
    %95 = math.rsqrt %94 : vector<8x1xf32>
    %96 = vector.broadcast %95 : vector<8x1xf32> to vector<8x384xf32>
    %97 = arith.mulf %92, %96 : vector<8x384xf32>
    %cst_19 = arith.constant 0.000000e+00 : f32
    %98 = vector.broadcast %cst_19 : f32 to vector<8x384xf32>
    %99 = arith.maximumf %97, %98 : vector<8x384xf32>
    %100 = tpu.concatenate %74, %99 in 1 : vector<8x384xf32>, vector<8x384xf32> -> vector<8x768xf32>
    %101 = vector.extract_strided_slice %100 {offsets = [0, 0], sizes = [8, 749], strides = [1, 1]} : vector<8x768xf32> to vector<8x749xf32>
    %102 = vector.extract_strided_slice %100 {offsets = [0, 1], sizes = [8, 749], strides = [1, 1]} : vector<8x768xf32> to vector<8x749xf32>
    %103 = arith.maximumf %101, %102 : vector<8x749xf32>
    %104 = vector.extract_strided_slice %100 {offsets = [0, 18], sizes = [8, 749], strides = [1, 1]} : vector<8x768xf32> to vector<8x749xf32>
    %105 = arith.maximumf %103, %104 : vector<8x749xf32>
    %106 = vector.extract_strided_slice %100 {offsets = [0, 19], sizes = [8, 749], strides = [1, 1]} : vector<8x768xf32> to vector<8x749xf32>
    %107 = arith.maximumf %105, %106 : vector<8x749xf32>
    %108 = arith.truncf %107 : vector<8x749xf32> to vector<8x749xbf16>
    %c0_20 = arith.constant 0 : index
    %c0_21 = arith.constant 0 : index
    %109 = vector.load %arg4[%c0_20, %c0_21] : memref<749x128xbf16, #tpu.memory_space<vmem>>, vector<749x128xbf16>
    %cst_22 = arith.constant dense<0.000000e+00> : vector<8x128xf32>
    %110 = tpu.matmul %108, %109, %cst_22 {dimension_numbers = #tpu.dot_dimension_numbers<[1], [0], [0], [1], [0, 0, 1, 1], [], []>} : vector<8x749xbf16>, vector<749x128xbf16>, vector<8x128xf32> -> vector<8x128xf32>
    %c0_23 = arith.constant 0 : index
    %c0_24 = arith.constant 0 : index
    %c0_25 = arith.constant 0 : index
    %111 = vector.load %arg5[%c0_23, %c0_24, %c0_25] : memref<1x8x128xf32, #tpu.memory_space<vmem>>, vector<1x8x128xf32>
    %112 = vector.shape_cast %111 : vector<1x8x128xf32> to vector<8x128xf32>
    %113 = vector.shape_cast %110 : vector<8x128xf32> to vector<1x8x128xf32>
    tpu.vector_store %arg5[%c0_23, %c0_24, %c0_25], %113 {strides = array<i32>} : memref<1x8x128xf32, #tpu.memory_space<vmem>>, vector<1x8x128xf32>,
    return
  }
  func.func @transform_0(%arg0: i32) -> (i32, i32, i32) {
    %c0_i32 = arith.constant 0 : i32
    %c0_i32_0 = arith.constant 0 : i32
    %c0_i32_1 = arith.constant 0 : i32
    return %arg0, %c0_i32, %c0_i32_0 : i32, i32, i32
  }
  func.func @transform_1(%arg0: i32) -> (i32, i32) {
    %c0_i32 = arith.constant 0 : i32
    %c0_i32_0 = arith.constant 0 : i32
    %c0_i32_1 = arith.constant 0 : i32
    return %c0_i32, %c0_i32_0 : i32, i32
  }
  func.func @transform_2(%arg0: i32) -> (i32, i32) {
    %c0_i32 = arith.constant 0 : i32
    %c0_i32_0 = arith.constant 0 : i32
    %c0_i32_1 = arith.constant 0 : i32
    return %c0_i32, %c0_i32_0 : i32, i32
  }
  func.func @transform_3(%arg0: i32) -> (i32, i32) {
    %c0_i32 = arith.constant 0 : i32
    %c0_i32_0 = arith.constant 0 : i32
    %c0_i32_1 = arith.constant 0 : i32
    return %c0_i32, %c0_i32_0 : i32, i32
  }
  func.func @transform_4(%arg0: i32) -> (i32, i32, i32) {
    %c0_i32 = arith.constant 0 : i32
    %c0_i32_0 = arith.constant 0 : i32
    %c0_i32_1 = arith.constant 0 : i32
    return %arg0, %c0_i32, %c0_i32_0 : i32, i32, i32
  }
}

</mosaic_0001>

<llo_original>
// kernel: tpu_custom_call.1
$region0: #{tpu_custom_call.1}
  #allocation0 [shape = 'u32[]', space=smem, size = 0x4, offset = 0x4, fixed_abs, tag = 'smem constant byte address 0x4 - core index']
  #allocation1 [shape = 'u32[144,128]{1,0:T(1,128)}', space=vmem, size = 0x12000, scoped, tag = 'internal scratch']
  %s0 = inlined_call_operand.hbm [shape: bf16[2,4,512], index: 0, kind: input, shape index: {}]
  %s1 = inlined_call_operand.hbm [shape: bf16[8,36], index: 1, kind: input, shape index: {}]
  %s2 = inlined_call_operand.vmem [shape: f32[1,384], index: 2, kind: input, shape index: {}]
  %s3 = inlined_call_operand.hbm [shape: bf16[749,128], index: 3, kind: input, shape index: {}]
  %s4 = inlined_call_operand.hbm [shape: f32[1,8,128], index: 4, kind: output, shape index: {}]
  %s5 = sld [smem:[#allocation0]]
  $region38: #{tpu_custom_call.1} parent=0
    _
  %s7 = ssub.s32 1, %s5
  %s8 = scalar_select 0, %s7, %s5
  $region1: #{tpu_custom_call.1} parent=0
    #allocation2 [shape = 'u8[8192]{0}', space=vmem, size = 0x2000, scoped, tag = 'input window, operand 0, single buffered']
    #allocation3 [shape = 's32[1]{0}', space=sflag, size = 0x4, scoped, tag = 'scoped memory for tpu_custom_call.1']
    #allocation4 [shape = 's32[1]{0}', space=sflag, size = 0x4, scoped, tag = 'scoped memory for tpu_custom_call.1']
    #allocation5 [shape = 'u8[2048]{0}', space=vmem, size = 0x800, scoped, tag = 'input window, operand 1, single buffered']
    #allocation6 [shape = 's32[1]{0}', space=sflag, size = 0x4, scoped, tag = 'scoped memory for tpu_custom_call.1']
    #allocation7 [shape = 'u8[192512]{0}', space=vmem, size = 0x2f000, scoped, tag = 'input window, operand 3, single buffered']
    #allocation8 [shape = 'u8[4096]{0}', space=vmem, size = 0x1000, scoped, tag = 'output window, operand 0, single buffered']
    %9 = vsyncpa [#allocation3], 0
    %10 = vsyncpa [#allocation6], 0
    %11 = vsyncpa [#allocation4], 0
    // Predicated region
    $region2: #{tpu_custom_call.1} parent=1 // pred_check
      _
    $region3: #{tpu_custom_call.1} parent=1 // pred_check_branch
      %13 = sbr.rel (0) target = $region5
    $region4: #{tpu_custom_call.1} parent=1 // pred_region
      %s15 = ssub.s32 256, 256
      %16 = vsyncadd [#allocation3], %s15
      %s17 = sshll.u32 [#allocation2], 4
      %s18 = int_to_ptr.vmem [resolvable:$true] %s17
      %23 = dma.hbm_to_vmem [thread:$0]  %s0, 256, %s18, [#allocation3], 128, 128, 8
    $region5: #{tpu_custom_call.1} parent=1 // pred_fallthru
      _
    // Predicated region
    $region6: #{tpu_custom_call.1} parent=1 // pred_check
      _
    $region7: #{tpu_custom_call.1} parent=1 // pred_check_branch
      %25 = sbr.rel (0) target = $region9
    $region8: #{tpu_custom_call.1} parent=1 // pred_region
      %s27 = ssub.s32 64, 64
      %28 = vsyncadd [#allocation6], %s27
      %s30 = sshll.u32 [#allocation5], 4
      %s31 = int_to_ptr.vmem [resolvable:$true] %s30
      %33 = dma.hbm_to_vmem [thread:$0]  %s1, 64, %s31, [#allocation6]
    $region9: #{tpu_custom_call.1} parent=1 // pred_fallthru
      _
    // Predicated region
    $region10: #{tpu_custom_call.1} parent=1 // pred_check
      _
    $region11: #{tpu_custom_call.1} parent=1 // pred_check_branch
      %35 = sbr.rel (0) target = $region13
    $region12: #{tpu_custom_call.1} parent=1 // pred_region
      _
    $region13: #{tpu_custom_call.1} parent=1 // pred_fallthru
      _
    // Predicated region
    $region14: #{tpu_custom_call.1} parent=1 // pred_check
      _
    $region15: #{tpu_custom_call.1} parent=1 // pred_check_branch
      %37 = sbr.rel (0) target = $region17
    $region16: #{tpu_custom_call.1} parent=1 // pred_region
      %s39 = ssub.s32 6016, 6016
      %40 = vsyncadd [#allocation6], %s39
      %s41 = sshll.u32 [#allocation7], 4
      %s42 = int_to_ptr.vmem [resolvable:$true] %s41
      %47 = dma.hbm_to_vmem [thread:$0]  %s3, 6016, %s42, [#allocation6], 64, 64, 4
    $region17: #{tpu_custom_call.1} parent=1 // pred_fallthru
      _
    // Predicated region
    $region18: #{tpu_custom_call.1} parent=1 // pred_check
      _
    $region19: #{tpu_custom_call.1} parent=1 // pred_check_branch
      %49 = sbr.rel (0) target = $region21
    $region20: #{tpu_custom_call.1} parent=1 // pred_region
      %50 = dma.done [#allocation3], 256
    $region21: #{tpu_custom_call.1} parent=1 // pred_fallthru
      _
    // Predicated region
    $region22: #{tpu_custom_call.1} parent=1 // pred_check
      _
    $region23: #{tpu_custom_call.1} parent=1 // pred_check_branch
      %52 = sbr.rel (0) target = $region25
    $region24: #{tpu_custom_call.1} parent=1 // pred_region
      %53 = dma.done [#allocation6], 64
    $region25: #{tpu_custom_call.1} parent=1 // pred_fallthru
      _
    // Predicated region
    $region26: #{tpu_custom_call.1} parent=1 // pred_check
      _
    $region27: #{tpu_custom_call.1} parent=1 // pred_check_branch
      %55 = sbr.rel (0) target = $region29
    $region28: #{tpu_custom_call.1} parent=1 // pred_region
      %56 = dma.done [#allocation6], 6016
    $region29: #{tpu_custom_call.1} parent=1 // pred_fallthru
      _
    %v58 = vld [vmem:[%s2] sm:$0x7]
    %v59 = vld [vmem:[#allocation2] sm:$0xff]
    %v60 = vld [vmem:[#allocation2 + $0x8] sm:$0xff]
    %v62 = vcombine.high %v59, %v59
    %v64 = vunpack.c.l.s4 1983009808
    %v65 = vunpack.c.0.s8 %v64
    %v66 = vlaneseq
    %v67 = vshrl.u32 %v66, 7
    %v68 = vsub.s32 %v65, %v67
    %v69 = vrot.slane %v59, %v68
    %v71 = vunpack.c.l.s4 1983009808
    %v72 = vunpack.c.0.s8 %v71
    %v73 = vlaneseq
    %v74 = vshrl.u32 %v73, 7
    %v75 = vsub.s32 %v72, %v74
    %v76 = vrot.slane %v62, %v75
    %v77 = vcombine.high %v69, %v69
    %v79 = vcombine.high %v60, %v60
    %v81 = vunpack.c.l.s4 1983009808
    %v82 = vunpack.c.0.s8 %v81
    %v83 = vlaneseq
    %v84 = vshrl.u32 %v83, 7
    %v85 = vsub.s32 %v82, %v84
    %v86 = vrot.slane %v60, %v85
    %v88 = vunpack.c.l.s4 1983009808
    %v89 = vunpack.c.0.s8 %v88
    %v90 = vlaneseq
    %v91 = vshrl.u32 %v90, 7
    %v92 = vsub.s32 %v89, %v91
    %v93 = vrot.slane %v79, %v92
    %v94 = vcombine.high %v86, %v86
    %v95 = vcombine.high %v76, %v76
    %96 = vrot.lane.b32.xlu0 %v69, 127
    %v97 = vpop.permute.xlu0 %96
    %98 = vrot.lane.b32.xlu0 %v77, 127
    %v99 = vpop.permute.xlu0 %98
    %100 = vrot.lane.b32.xlu0 %v76, 127
    %v101 = vpop.permute.xlu0 %100
    %102 = vrot.lane.b32.xlu0 %v95, 127
    %v103 = vpop.permute.xlu0 %102
    %vm104 = vcmask 1039360
    %v105 = vsel %vm104, %v97, %v99
    %v106 = vsel %vm104, %v99, %v101
    %v107 = vsel %vm104, %v101, %v103
    %v108 = vcombine.high %v93, %v93
    %109 = vrot.lane.b32.xlu0 %v86, 127
    %v110 = vpop.permute.xlu0 %109
    %111 = vrot.lane.b32.xlu0 %v94, 127
    %v112 = vpop.permute.xlu0 %111
    %113 = vrot.lane.b32.xlu0 %v93, 127
    %v114 = vpop.permute.xlu0 %113
    %115 = vrot.lane.b32.xlu0 %v108, 127
    %v116 = vpop.permute.xlu0 %115
    %v117 = vsel %vm104, %v110, %v112
    %v118 = vsel %vm104, %v112, %v114
    %v119 = vsel %vm104, %v114, %v116
    %120 = vrot.lane.b32.xlu0 %v69, 126
    %v121 = vpop.permute.xlu0 %120
    %122 = vrot.lane.b32.xlu0 %v77, 126
    %v123 = vpop.permute.xlu0 %122
    %124 = vrot.lane.b32.xlu0 %v76, 126
    %v125 = vpop.permute.xlu0 %124
    %126 = vrot.lane.b32.xlu0 %v95, 126
    %v127 = vpop.permute.xlu0 %126
    %vm128 = vcmask 1031168
    %v129 = vsel %vm128, %v121, %v123
    %v130 = vsel %vm128, %v123, %v125
    %v131 = vsel %vm128, %v125, %v127
    %132 = vrot.lane.b32.xlu0 %v86, 126
    %v133 = vpop.permute.xlu0 %132
    %134 = vrot.lane.b32.xlu0 %v94, 126
    %v135 = vpop.permute.xlu0 %134
    %136 = vrot.lane.b32.xlu0 %v93, 126
    %v137 = vpop.permute.xlu0 %136
    %138 = vrot.lane.b32.xlu0 %v108, 126
    %v139 = vpop.permute.xlu0 %138
    %v140 = vsel %vm128, %v133, %v135
    %v141 = vsel %vm128, %v135, %v137
    %v142 = vsel %vm128, %v137, %v139
    %143 = vrot.lane.b32.xlu0 %v69, 110
    %v144 = vpop.permute.xlu0 %143
    %145 = vrot.lane.b32.xlu0 %v77, 110
    %v146 = vpop.permute.xlu0 %145
    %147 = vrot.lane.b32.xlu0 %v76, 110
    %v148 = vpop.permute.xlu0 %147
    %149 = vrot.lane.b32.xlu0 %v95, 110
    %v150 = vpop.permute.xlu0 %149
    %vm151 = vcmask 900096
    %v152 = vsel %vm151, %v144, %v146
    %v153 = vsel %vm151, %v146, %v148
    %v154 = vsel %vm151, %v148, %v150
    %155 = vrot.lane.b32.xlu0 %v86, 110
    %v156 = vpop.permute.xlu0 %155
    %157 = vrot.lane.b32.xlu0 %v94, 110
    %v158 = vpop.permute.xlu0 %157
    %159 = vrot.lane.b32.xlu0 %v93, 110
    %v160 = vpop.permute.xlu0 %159
    %161 = vrot.lane.b32.xlu0 %v108, 110
    %v162 = vpop.permute.xlu0 %161
    %v163 = vsel %vm151, %v156, %v158
    %v164 = vsel %vm151, %v158, %v160
    %v165 = vsel %vm151, %v160, %v162
    %166 = vrot.lane.b32.xlu0 %v69, 109
    %v167 = vpop.permute.xlu0 %166
    %168 = vrot.lane.b32.xlu0 %v77, 109
    %v169 = vpop.permute.xlu0 %168
    %170 = vrot.lane.b32.xlu0 %v76, 109
    %v171 = vpop.permute.xlu0 %170
    %172 = vrot.lane.b32.xlu0 %v95, 109
    %v173 = vpop.permute.xlu0 %172
    %vm174 = vcmask 891904
    %v175 = vsel %vm174, %v167, %v169
    %v176 = vsel %vm174, %v169, %v171
    %v177 = vsel %vm174, %v171, %v173
    %178 = vrot.lane.b32.xlu0 %v86, 109
    %v179 = vpop.permute.xlu0 %178
    %180 = vrot.lane.b32.xlu0 %v94, 109
    %v181 = vpop.permute.xlu0 %180
    %182 = vrot.lane.b32.xlu0 %v93, 109
    %v183 = vpop.permute.xlu0 %182
    %184 = vrot.lane.b32.xlu0 %v108, 109
    %v185 = vpop.permute.xlu0 %184
    %v186 = vsel %vm174, %v179, %v181
    %v187 = vsel %vm174, %v181, %v183
    %v188 = vsel %vm174, %v183, %v185
    %189 = vrot.lane.b32.xlu0 %v69, 108
    %v190 = vpop.permute.xlu0 %189
    %191 = vrot.lane.b32.xlu0 %v77, 108
    %v192 = vpop.permute.xlu0 %191
    %193 = vrot.lane.b32.xlu0 %v76, 108
    %v194 = vpop.permute.xlu0 %193
    %195 = vrot.lane.b32.xlu0 %v95, 108
    %v196 = vpop.permute.xlu0 %195
    %vm197 = vcmask 883712
    %v198 = vsel %vm197, %v190, %v192
    %v199 = vsel %vm197, %v192, %v194
    %v200 = vsel %vm197, %v194, %v196
    %201 = vrot.lane.b32.xlu0 %v86, 108
    %v202 = vpop.permute.xlu0 %201
    %203 = vrot.lane.b32.xlu0 %v94, 108
    %v204 = vpop.permute.xlu0 %203
    %205 = vrot.lane.b32.xlu0 %v93, 108
    %v206 = vpop.permute.xlu0 %205
    %207 = vrot.lane.b32.xlu0 %v108, 108
    %v208 = vpop.permute.xlu0 %207
    %v209 = vsel %vm197, %v202, %v204
    %v210 = vsel %vm197, %v204, %v206
    %v211 = vsel %vm197, %v206, %v208
    %212 = vrot.lane.b32.xlu0 %v69, 92
    %v213 = vpop.permute.xlu0 %212
    %214 = vrot.lane.b32.xlu0 %v77, 92
    %v215 = vpop.permute.xlu0 %214
    %216 = vrot.lane.b32.xlu0 %v76, 92
    %v217 = vpop.permute.xlu0 %216
    %218 = vrot.lane.b32.xlu0 %v95, 92
    %v219 = vpop.permute.xlu0 %218
    %vm220 = vcmask 752640
    %v221 = vsel %vm220, %v213, %v215
    %v222 = vsel %vm220, %v215, %v217
    %v223 = vsel %vm220, %v217, %v219
    %224 = vrot.lane.b32.xlu0 %v86, 92
    %v225 = vpop.permute.xlu0 %224
    %226 = vrot.lane.b32.xlu0 %v94, 92
    %v227 = vpop.permute.xlu0 %226
    %228 = vrot.lane.b32.xlu0 %v93, 92
    %v229 = vpop.permute.xlu0 %228
    %230 = vrot.lane.b32.xlu0 %v108, 92
    %v231 = vpop.permute.xlu0 %230
    %v232 = vsel %vm220, %v225, %v227
    %v233 = vsel %vm220, %v227, %v229
    %v234 = vsel %vm220, %v229, %v231
    %235 = vrot.lane.b32.xlu0 %v69, 91
    %v236 = vpop.permute.xlu0 %235
    %237 = vrot.lane.b32.xlu0 %v77, 91
    %v238 = vpop.permute.xlu0 %237
    %239 = vrot.lane.b32.xlu0 %v76, 91
    %v240 = vpop.permute.xlu0 %239
    %241 = vrot.lane.b32.xlu0 %v95, 91
    %v242 = vpop.permute.xlu0 %241
    %vm243 = vcmask 744448
    %v244 = vsel %vm243, %v236, %v238
    %v245 = vsel %vm243, %v238, %v240
    %v246 = vsel %vm243, %v240, %v242
    %247 = vrot.lane.b32.xlu0 %v86, 91
    %v248 = vpop.permute.xlu0 %247
    %249 = vrot.lane.b32.xlu0 %v94, 91
    %v250 = vpop.permute.xlu0 %249
    %251 = vrot.lane.b32.xlu0 %v93, 91
    %v252 = vpop.permute.xlu0 %251
    %253 = vrot.lane.b32.xlu0 %v108, 91
    %v254 = vpop.permute.xlu0 %253
    %v255 = vsel %vm243, %v248, %v250
    %v256 = vsel %vm243, %v250, %v252
    %v257 = vsel %vm243, %v252, %v254
    %258 = vrot.lane.b32.xlu0 %v69, 90
    %v259 = vpop.permute.xlu0 %258
    %260 = vrot.lane.b32.xlu0 %v77, 90
    %v261 = vpop.permute.xlu0 %260
    %262 = vrot.lane.b32.xlu0 %v76, 90
    %v263 = vpop.permute.xlu0 %262
    %264 = vrot.lane.b32.xlu0 %v95, 90
    %v265 = vpop.permute.xlu0 %264
    %vm266 = vcmask 736256
    %v267 = vsel %vm266, %v259, %v261
    %v268 = vsel %vm266, %v261, %v263
    %v269 = vsel %vm266, %v263, %v265
    %270 = vrot.lane.b32.xlu0 %v86, 90
    %v271 = vpop.permute.xlu0 %270
    %272 = vrot.lane.b32.xlu0 %v94, 90
    %v273 = vpop.permute.xlu0 %272
    %274 = vrot.lane.b32.xlu0 %v93, 90
    %v275 = vpop.permute.xlu0 %274
    %276 = vrot.lane.b32.xlu0 %v108, 90
    %v277 = vpop.permute.xlu0 %276
    %v278 = vsel %vm266, %v271, %v273
    %v279 = vsel %vm266, %v273, %v275
    %v280 = vsel %vm266, %v275, %v277
    %v281 = vrot.slane %v105, 6
    %v282 = vrot.slane %v106, 6
    %v283 = vrot.slane %v107, 6
    %v284 = vrot.slane %v117, 6
    %v285 = vrot.slane %v118, 6
    %v286 = vrot.slane %v119, 6
    %v287 = vrot.slane %v129, 4
    %v288 = vrot.slane %v130, 4
    %v289 = vrot.slane %v131, 4
    %v290 = vrot.slane %v140, 4
    %v291 = vrot.slane %v141, 4
    %v292 = vrot.slane %v142, 4
    %v293 = vrot.slane %v152, 2
    %v294 = vrot.slane %v153, 2
    %v295 = vrot.slane %v154, 2
    %v296 = vrot.slane %v163, 2
    %v297 = vrot.slane %v164, 2
    %v298 = vrot.slane %v165, 2
    %v299 = vrot.slane %v198, 6
    %v300 = vrot.slane %v199, 6
    %v301 = vrot.slane %v200, 6
    %v302 = vrot.slane %v209, 6
    %v303 = vrot.slane %v210, 6
    %v304 = vrot.slane %v211, 6
    %v305 = vrot.slane %v221, 4
    %v306 = vrot.slane %v222, 4
    %v307 = vrot.slane %v223, 4
    %v308 = vrot.slane %v232, 4
    %v309 = vrot.slane %v233, 4
    %v310 = vrot.slane %v234, 4
    %v311 = vrot.slane %v244, 2
    %v312 = vrot.slane %v245, 2
    %v313 = vrot.slane %v246, 2
    %v314 = vrot.slane %v255, 2
    %v315 = vrot.slane %v256, 2
    %v316 = vrot.slane %v257, 2
    %vm317 = vcmask 1041408
    %v320 = vsel %vm317, %v69, %v281
    %v323 = vsel %vm317, %v77, %v282
    %v326 = vsel %vm317, %v76, %v283
    %v329 = vsel %vm317, %v86, %v284
    %v332 = vsel %vm317, %v94, %v285
    %v335 = vsel %vm317, %v93, %v286
    %vm336 = vcmask 1043456
    %v338 = vsel %vm336, %v320, %v287
    %v340 = vsel %vm336, %v323, %v288
    %v342 = vsel %vm336, %v326, %v289
    %v344 = vsel %vm336, %v329, %v290
    %v346 = vsel %vm336, %v332, %v291
    %v348 = vsel %vm336, %v335, %v292
    %vm349 = vcmask 1045504
    %v351 = vsel %vm349, %v338, %v293
    %v354 = vsel %vm349, %v340, %v294
    %v357 = vsel %vm349, %v342, %v295
    %v360 = vsel %vm349, %v344, %v296
    %v363 = vsel %vm349, %v346, %v297
    %v366 = vsel %vm349, %v348, %v298
    %v370 = vsel %vm317, %v175, %v299
    %v373 = vsel %vm317, %v176, %v300
    %v376 = vsel %vm317, %v177, %v301
    %v379 = vsel %vm317, %v186, %v302
    %v382 = vsel %vm317, %v187, %v303
    %v385 = vsel %vm317, %v188, %v304
    %v387 = vsel %vm336, %v370, %v305
    %v389 = vsel %vm336, %v373, %v306
    %v391 = vsel %vm336, %v376, %v307
    %v393 = vsel %vm336, %v379, %v308
    %v395 = vsel %vm336, %v382, %v309
    %v397 = vsel %vm336, %v385, %v310
    %v399 = vsel %vm349, %v387, %v311
    %v402 = vsel %vm349, %v389, %v312
    %v405 = vsel %vm349, %v391, %v313
    %v408 = vsel %vm349, %v393, %v314
    %v411 = vsel %vm349, %v395, %v315
    %v414 = vsel %vm349, %v397, %v316
    %v416 = vld [vmem:[#allocation5] sm:$0xf]
    %vm417 = vcmask 293888
    %v419 = vsel %vm417, %v416, 0
    %v422 = vsel %vm317, %v267, 0
    %v425 = vsel %vm317, %v268, 0
    %v428 = vsel %vm317, %v269, 0
    %v431 = vsel %vm317, %v278, 0
    %v434 = vsel %vm317, %v279, 0
    %v437 = vsel %vm317, %v280, 0
    %439 = vmatprep.subr.bf16.mxu0 %v354
    %440 = vmatpush1.bf16.msra.mxu0 %v351
    %441 = vmatprep.subr.bf16.mxu0 %v402
    %442 = vmatpush1.bf16.msra.mxu0 %v399
    %443 = vmatprep.subr.bf16.mxu0 %v425
    %444 = vmatpush1.bf16.msra.mxu0 %v422
    %445 = vmatprep.subr.bf16.mxu0 0
    %446 = vmatpush1.bf16.msra.mxu0 0
    %447 = vmatprep.subr.bf16.mxu0 0
    %448 = vmatpush1.bf16.msra.mxu0 0
    %449 = vmatprep.subr.bf16.mxu0 0
    %450 = vmatpush1.bf16.msra.mxu0 0
    %451 = vmatprep.subr.bf16.mxu0 0
    %452 = vmatpush1.bf16.msra.mxu0 0
    %453 = vmatprep.subr.bf16.mxu0 0
    %454 = vmatpush1.bf16.msra.mxu0 0
    %455 = vmatprep.subr.bf16.mxu0 0
    %456 = vmatpush1.bf16.msra.mxu0 0
    %457 = vmatprep.subr.bf16.mxu0 0
    %458 = vmatpush1.bf16.msra.mxu0 0
    %459 = vmatprep.subr.bf16.mxu0 0
    %460 = vmatpush1.bf16.msra.mxu0 0
    %461 = vmatprep.subr.bf16.mxu0 0
    %462 = vmatpush1.bf16.msra.mxu0 0
    %463 = vmatprep.subr.bf16.mxu0 0
    %464 = vmatpush1.bf16.msra.mxu0 0
    %465 = vmatprep.subr.bf16.mxu0 0
    %466 = vmatpush1.bf16.msra.mxu0 0
    %467 = vmatprep.subr.bf16.mxu0 0
    %468 = vmatpush1.bf16.msra.mxu0 0
    %469 = vmatprep.subr.bf16.mxu0 0
    %470 = vmatpush1.bf16.msra.mxu0 0
    %471 = vmatprep.mubr.bf16.mxu0 0
    %472 = vmatmul.mubr.bf16.gmra.mrb[0].mxu0 %v419
    %v473 = vpop.f32.mrb[0].mxu0
    %v474 = vadd.f32 0.0, %v473
    %v475 = vpop.f32.mrb[0].mxu0
    %v476 = vadd.f32 0.0, %v475
    %v477 = vpop.f32.mrb[0].mxu0
    %v478 = vpop.f32.mrb[0].mxu0
    %479 = vdwg.mxu0
    %480 = vmatprep.subr.bf16.mxu0 %v360
    %481 = vmatpush1.bf16.msra.mxu0 %v357
    %482 = vmatprep.subr.bf16.mxu0 %v408
    %483 = vmatpush1.bf16.msra.mxu0 %v405
    %484 = vmatprep.subr.bf16.mxu0 %v431
    %485 = vmatpush1.bf16.msra.mxu0 %v428
    %486 = vmatprep.subr.bf16.mxu0 0
    %487 = vmatpush1.bf16.msra.mxu0 0
    %488 = vmatprep.subr.bf16.mxu0 0
    %489 = vmatpush1.bf16.msra.mxu0 0
    %490 = vmatprep.subr.bf16.mxu0 0
    %491 = vmatpush1.bf16.msra.mxu0 0
    %492 = vmatprep.subr.bf16.mxu0 0
    %493 = vmatpush1.bf16.msra.mxu0 0
    %494 = vmatprep.subr.bf16.mxu0 0
    %495 = vmatpush1.bf16.msra.mxu0 0
    %496 = vmatprep.subr.bf16.mxu0 0
    %497 = vmatpush1.bf16.msra.mxu0 0
    %498 = vmatprep.subr.bf16.mxu0 0
    %499 = vmatpush1.bf16.msra.mxu0 0
    %500 = vmatprep.subr.bf16.mxu0 0
    %501 = vmatpush1.bf16.msra.mxu0 0
    %502 = vmatprep.subr.bf16.mxu0 0
    %503 = vmatpush1.bf16.msra.mxu0 0
    %504 = vmatprep.subr.bf16.mxu0 0
    %505 = vmatpush1.bf16.msra.mxu0 0
    %506 = vmatprep.subr.bf16.mxu0 0
    %507 = vmatpush1.bf16.msra.mxu0 0
    %508 = vmatprep.subr.bf16.mxu0 0
    %509 = vmatpush1.bf16.msra.mxu0 0
    %510 = vmatprep.subr.bf16.mxu0 0
    %511 = vmatpush1.bf16.msra.mxu0 0
    %512 = vmatprep.mubr.bf16.mxu0 0
    %513 = vmatmul.mubr.bf16.gmra.mrb[0].mxu0 %v419
    %v514 = vpop.f32.mrb[0].mxu0
    %v515 = vadd.f32 0.0, %v514
    %v516 = vpop.f32.mrb[0].mxu0
    %v517 = vadd.f32 0.0, %v516
    %v518 = vpop.f32.mrb[0].mxu0
    %v519 = vpop.f32.mrb[0].mxu0
    %520 = vdwg.mxu0
    %521 = vmatprep.subr.bf16.mxu0 %v366
    %522 = vmatpush1.bf16.msra.mxu0 %v363
    %523 = vmatprep.subr.bf16.mxu0 %v414
    %524 = vmatpush1.bf16.msra.mxu0 %v411
    %525 = vmatprep.subr.bf16.mxu0 %v437
    %526 = vmatpush1.bf16.msra.mxu0 %v434
    %527 = vmatprep.subr.bf16.mxu0 0
    %528 = vmatpush1.bf16.msra.mxu0 0
    %529 = vmatprep.subr.bf16.mxu0 0
    %530 = vmatpush1.bf16.msra.mxu0 0
    %531 = vmatprep.subr.bf16.mxu0 0
    %532 = vmatpush1.bf16.msra.mxu0 0
    %533 = vmatprep.subr.bf16.mxu0 0
    %534 = vmatpush1.bf16.msra.mxu0 0
    %535 = vmatprep.subr.bf16.mxu0 0
    %536 = vmatpush1.bf16.msra.mxu0 0
    %537 = vmatprep.subr.bf16.mxu0 0
    %538 = vmatpush1.bf16.msra.mxu0 0
    %539 = vmatprep.subr.bf16.mxu0 0
    %540 = vmatpush1.bf16.msra.mxu0 0
    %541 = vmatprep.subr.bf16.mxu0 0
    %542 = vmatpush1.bf16.msra.mxu0 0
    %543 = vmatprep.subr.bf16.mxu0 0
    %544 = vmatpush1.bf16.msra.mxu0 0
    %545 = vmatprep.subr.bf16.mxu0 0
    %546 = vmatpush1.bf16.msra.mxu0 0
    %547 = vmatprep.subr.bf16.mxu0 0
    %548 = vmatpush1.bf16.msra.mxu0 0
    %549 = vmatprep.subr.bf16.mxu0 0
    %550 = vmatpush1.bf16.msra.mxu0 0
    %551 = vmatprep.subr.bf16.mxu0 0
    %552 = vmatpush1.bf16.msra.mxu0 0
    %553 = vmatprep.mubr.bf16.mxu0 0
    %554 = vmatmul.mubr.bf16.gmra.mrb[0].mxu0 %v419
    %v555 = vpop.f32.mrb[0].mxu0
    %v556 = vadd.f32 0.0, %v555
    %v557 = vpop.f32.mrb[0].mxu0
    %v558 = vadd.f32 0.0, %v557
    %v559 = vpop.f32.mrb[0].mxu0
    %v560 = vpop.f32.mrb[0].mxu0
    %561 = vdwg.mxu0
    %v563 = vlaneseq
    %v564 = vshrl.u32 %v563, 7
    %v565 = vsub.s32 0, %v564
    %v566 = vrot.slane %v58, %v565
    %v567 = vlaneseq
    %v568 = vshrl.u32 %v567, 7
    %v569 = vsub.s32 1, %v568
    %v570 = vrot.slane %v58, %v569
    %v571 = vlaneseq
    %v572 = vshrl.u32 %v571, 7
    %v573 = vsub.s32 2, %v572
    %v574 = vrot.slane %v58, %v573
    %v578 = vmul.f32 %v474, %v566
    %v579 = vmul.f32 %v476, %v570
    %v580 = vmul.f32 %v515, %v574
    %v581 = vadd.f32 %v578, %v579
    %v582 = vadd.f32 %v581, %v580
    %583 = vadd.xlane.f32.xlu0 %v582
    %v584 = vpop.xlane.xlu0 %583
    %v585 = vmul.f32 %v584, 0.00390625
    %v586 = vmul.f32 %v578, %v474
    %v587 = vmul.f32 %v579, %v476
    %v588 = vmul.f32 %v580, %v515
    %v589 = vadd.f32 %v586, %v587
    %v590 = vadd.f32 %v589, %v588
    %591 = vadd.xlane.f32.xlu0 %v590
    %v592 = vpop.xlane.xlu0 %591
    %v593 = vmul.f32 %v592, 0.00390625
    %v594 = vmul.f32 %v585, %v585
    %v595 = vsub.f32 %v593, %v594
    %v596 = vmax.f32 %v595, 0.0
    %v597 = vsub.f32 %v474, %v585
    %v598 = vsub.f32 %v476, %v585
    %v599 = vsub.f32 %v515, %v585
    %v600 = vadd.f32 %v596, 1e-05
    %v601 = vrsqrt.pop %v600
    %v602 = vmul.f32 %v597, %v601
    %v603 = vmul.f32 %v598, %v601
    %v604 = vmul.f32 %v599, %v601
    %v605 = vmax.f32 %v602, 0.0
    %v606 = vmax.f32 %v603, 0.0
    %v607 = vmax.f32 %v604, 0.0
    %v608 = vmul.f32 %v517, %v566
    %v609 = vmul.f32 %v556, %v570
    %v610 = vmul.f32 %v558, %v574
    %v611 = vadd.f32 %v608, %v609
    %v612 = vadd.f32 %v611, %v610
    %613 = vadd.xlane.f32.xlu0 %v612
    %v614 = vpop.xlane.xlu0 %613
    %v615 = vmul.f32 %v614, 0.00390625
    %v616 = vmul.f32 %v608, %v517
    %v617 = vmul.f32 %v609, %v556
    %v618 = vmul.f32 %v610, %v558
    %v619 = vadd.f32 %v616, %v617
    %v620 = vadd.f32 %v619, %v618
    %621 = vadd.xlane.f32.xlu0 %v620
    %v622 = vpop.xlane.xlu0 %621
    %v623 = vmul.f32 %v622, 0.00390625
    %v624 = vmul.f32 %v615, %v615
    %v625 = vsub.f32 %v623, %v624
    %v626 = vmax.f32 %v625, 0.0
    %v627 = vsub.f32 %v517, %v615
    %v628 = vsub.f32 %v556, %v615
    %v629 = vsub.f32 %v558, %v615
    %v630 = vadd.f32 %v626, 1e-05
    %v631 = vrsqrt.pop %v630
    %v632 = vmul.f32 %v627, %v631
    %v633 = vmul.f32 %v628, %v631
    %v634 = vmul.f32 %v629, %v631
    %v635 = vmax.f32 %v632, 0.0
    %v636 = vmax.f32 %v633, 0.0
    %v637 = vmax.f32 %v634, 0.0
    %644 = vrot.lane.b32.xlu0 %v605, 127
    %v645 = vpop.permute.xlu0 %644
    %646 = vrot.lane.b32.xlu0 %v606, 127
    %v647 = vpop.permute.xlu0 %646
    %648 = vrot.lane.b32.xlu0 %v607, 127
    %v649 = vpop.permute.xlu0 %648
    %650 = vrot.lane.b32.xlu0 %v635, 127
    %v651 = vpop.permute.xlu0 %650
    %652 = vrot.lane.b32.xlu0 %v636, 127
    %v653 = vpop.permute.xlu0 %652
    %654 = vrot.lane.b32.xlu0 %v637, 127
    %v655 = vpop.permute.xlu0 %654
    %vm656 = vcmask 1039360
    %v657 = vsel %vm656, %v645, %v647
    %v658 = vsel %vm656, %v647, %v649
    %v659 = vsel %vm656, %v649, %v651
    %v660 = vsel %vm656, %v651, %v653
    %v661 = vsel %vm656, %v653, %v655
    %v668 = vmax.f32 %v605, %v657
    %v669 = vmax.f32 %v606, %v658
    %v670 = vmax.f32 %v607, %v659
    %v671 = vmax.f32 %v635, %v660
    %v672 = vmax.f32 %v636, %v661
    %v673 = vmax.f32 %v637, %v655
    %674 = vrot.lane.b32.xlu0 %v605, 110
    %v675 = vpop.permute.xlu0 %674
    %676 = vrot.lane.b32.xlu0 %v606, 110
    %v677 = vpop.permute.xlu0 %676
    %678 = vrot.lane.b32.xlu0 %v607, 110
    %v679 = vpop.permute.xlu0 %678
    %680 = vrot.lane.b32.xlu0 %v635, 110
    %v681 = vpop.permute.xlu0 %680
    %682 = vrot.lane.b32.xlu0 %v636, 110
    %v683 = vpop.permute.xlu0 %682
    %684 = vrot.lane.b32.xlu0 %v637, 110
    %v685 = vpop.permute.xlu0 %684
    %vm686 = vcmask 900096
    %v687 = vsel %vm686, %v675, %v677
    %v688 = vsel %vm686, %v677, %v679
    %v689 = vsel %vm686, %v679, %v681
    %v690 = vsel %vm686, %v681, %v683
    %v691 = vsel %vm686, %v683, %v685
    %v698 = vmax.f32 %v668, %v687
    %v699 = vmax.f32 %v669, %v688
    %v700 = vmax.f32 %v670, %v689
    %v701 = vmax.f32 %v671, %v690
    %v702 = vmax.f32 %v672, %v691
    %v703 = vmax.f32 %v673, %v685
    %704 = vrot.lane.b32.xlu0 %v605, 109
    %v705 = vpop.permute.xlu0 %704
    %706 = vrot.lane.b32.xlu0 %v606, 109
    %v707 = vpop.permute.xlu0 %706
    %708 = vrot.lane.b32.xlu0 %v607, 109
    %v709 = vpop.permute.xlu0 %708
    %710 = vrot.lane.b32.xlu0 %v635, 109
    %v711 = vpop.permute.xlu0 %710
    %712 = vrot.lane.b32.xlu0 %v636, 109
    %v713 = vpop.permute.xlu0 %712
    %714 = vrot.lane.b32.xlu0 %v637, 109
    %v715 = vpop.permute.xlu0 %714
    %vm716 = vcmask 891904
    %v717 = vsel %vm716, %v705, %v707
    %v718 = vsel %vm716, %v707, %v709
    %v719 = vsel %vm716, %v709, %v711
    %v720 = vsel %vm716, %v711, %v713
    %v721 = vsel %vm716, %v713, %v715
    %v728 = vmax.f32 %v698, %v717
    %v729 = vmax.f32 %v699, %v718
    %v730 = vmax.f32 %v700, %v719
    %v731 = vmax.f32 %v701, %v720
    %v732 = vmax.f32 %v702, %v721
    %v733 = vmax.f32 %v703, %v715
    %v734 = vpack.c.bf16 %v728, %v728
    %v735 = vpack.c.bf16 %v729, %v729
    %v736 = vpack.c.bf16 %v730, %v730
    %v737 = vpack.c.bf16 %v731, %v731
    %v738 = vpack.c.bf16 %v732, %v732
    %v739 = vpack.c.bf16 %v733, %v733
    %v740 = vld [vmem:[#allocation7] sm:$0xf]
    %v741 = vld [vmem:[#allocation7 + $0x4] sm:$0xf]
    %v742 = vld [vmem:[#allocation7 + $0x8] sm:$0xf]
    %v743 = vld [vmem:[#allocation7 + $0xc] sm:$0xf]
    %v744 = vld [vmem:[#allocation7 + $0x10] sm:$0xf]
    %v745 = vld [vmem:[#allocation7 + $0x14] sm:$0xf]
    %v746 = vld [vmem:[#allocation7 + $0x18] sm:$0xf]
    %v747 = vld [vmem:[#allocation7 + $0x1c] sm:$0xf]
    %v748 = vld [vmem:[#allocation7 + $0x20] sm:$0xf]
    %v749 = vld [vmem:[#allocation7 + $0x24] sm:$0xf]
    %v750 = vld [vmem:[#allocation7 + $0x28] sm:$0xf]
    %v751 = vld [vmem:[#allocation7 + $0x2c] sm:$0xf]
    %v752 = vld [vmem:[#allocation7 + $0x30] sm:$0xf]
    %v753 = vld [vmem:[#allocation7 + $0x34] sm:$0xf]
    %v754 = vld [vmem:[#allocation7 + $0x38] sm:$0xf]
    %v755 = vld [vmem:[#allocation7 + $0x3c] sm:$0xf]
    %v756 = vld [vmem:[#allocation7 + $0x40] sm:$0xf]
    %v757 = vld [vmem:[#allocation7 + $0x44] sm:$0xf]
    %v758 = vld [vmem:[#allocation7 + $0x48] sm:$0xf]
    %v759 = vld [vmem:[#allocation7 + $0x4c] sm:$0xf]
    %v760 = vld [vmem:[#allocation7 + $0x50] sm:$0xf]
    %v761 = vld [vmem:[#allocation7 + $0x54] sm:$0xf]
    %v762 = vld [vmem:[#allocation7 + $0x58] sm:$0xf]
    %v763 = vld [vmem:[#allocation7 + $0x5c] sm:$0xf]
    %v764 = vld [vmem:[#allocation7 + $0x60] sm:$0xf]
    %v765 = vld [vmem:[#allocation7 + $0x64] sm:$0xf]
    %v766 = vld [vmem:[#allocation7 + $0x68] sm:$0xf]
    %v767 = vld [vmem:[#allocation7 + $0x6c] sm:$0xf]
    %v768 = vld [vmem:[#allocation7 + $0x70] sm:$0xf]
    %v769 = vld [vmem:[#allocation7 + $0x74] sm:$0xf]
    %v770 = vld [vmem:[#allocation7 + $0x78] sm:$0xf]
    %v771 = vld [vmem:[#allocation7 + $0x7c] sm:$0xf]
    %v772 = vld [vmem:[#allocation7 + $0x80] sm:$0xf]
    %v773 = vld [vmem:[#allocation7 + $0x84] sm:$0xf]
    %v774 = vld [vmem:[#allocation7 + $0x88] sm:$0xf]
    %v775 = vld [vmem:[#allocation7 + $0x8c] sm:$0xf]
    %v776 = vld [vmem:[#allocation7 + $0x90] sm:$0xf]
    %v777 = vld [vmem:[#allocation7 + $0x94] sm:$0xf]
    %v778 = vld [vmem:[#allocation7 + $0x98] sm:$0xf]
    %v779 = vld [vmem:[#allocation7 + $0x9c] sm:$0xf]
    %v780 = vld [vmem:[#allocation7 + $0xa0] sm:$0xf]
    %v781 = vld [vmem:[#allocation7 + $0xa4] sm:$0xf]
    %v782 = vld [vmem:[#allocation7 + $0xa8] sm:$0xf]
    %v783 = vld [vmem:[#allocation7 + $0xac] sm:$0xf]
    %v784 = vld [vmem:[#allocation7 + $0xb0] sm:$0xf]
    %v785 = vld [vmem:[#allocation7 + $0xb4] sm:$0xf]
    %v786 = vld [vmem:[#allocation7 + $0xb8] sm:$0xf]
    %v787 = vld [vmem:[#allocation7 + $0xbc] sm:$0xf]
    %v788 = vld [vmem:[#allocation7 + $0xc0] sm:$0xf]
    %v789 = vld [vmem:[#allocation7 + $0xc4] sm:$0xf]
    %v790 = vld [vmem:[#allocation7 + $0xc8] sm:$0xf]
    %v791 = vld [vmem:[#allocation7 + $0xcc] sm:$0xf]
    %v792 = vld [vmem:[#allocation7 + $0xd0] sm:$0xf]
    %v793 = vld [vmem:[#allocation7 + $0xd4] sm:$0xf]
    %v794 = vld [vmem:[#allocation7 + $0xd8] sm:$0xf]
    %v795 = vld [vmem:[#allocation7 + $0xdc] sm:$0xf]
    %v796 = vld [vmem:[#allocation7 + $0xe0] sm:$0xf]
    %v797 = vld [vmem:[#allocation7 + $0xe4] sm:$0xf]
    %v798 = vld [vmem:[#allocation7 + $0xe8] sm:$0xf]
    %v799 = vld [vmem:[#allocation7 + $0xec] sm:$0xf]
    %v800 = vld [vmem:[#allocation7 + $0xf0] sm:$0xf]
    %v801 = vld [vmem:[#allocation7 + $0xf4] sm:$0xf]
    %v802 = vld [vmem:[#allocation7 + $0xf8] sm:$0xf]
    %v803 = vld [vmem:[#allocation7 + $0xfc] sm:$0xf]
    %v804 = vld [vmem:[#allocation7 + $0x100] sm:$0xf]
    %v805 = vld [vmem:[#allocation7 + $0x104] sm:$0xf]
    %v806 = vld [vmem:[#allocation7 + $0x108] sm:$0xf]
    %v807 = vld [vmem:[#allocation7 + $0x10c] sm:$0xf]
    %v808 = vld [vmem:[#allocation7 + $0x110] sm:$0xf]
    %v809 = vld [vmem:[#allocation7 + $0x114] sm:$0xf]
    %v810 = vld [vmem:[#allocation7 + $0x118] sm:$0xf]
    %v811 = vld [vmem:[#allocation7 + $0x11c] sm:$0xf]
    %v812 = vld [vmem:[#allocation7 + $0x120] sm:$0xf]
    %v813 = vld [vmem:[#allocation7 + $0x124] sm:$0xf]
    %v814 = vld [vmem:[#allocation7 + $0x128] sm:$0xf]
    %v815 = vld [vmem:[#allocation7 + $0x12c] sm:$0xf]
    %v816 = vld [vmem:[#allocation7 + $0x130] sm:$0xf]
    %v817 = vld [vmem:[#allocation7 + $0x134] sm:$0xf]
    %v818 = vld [vmem:[#allocation7 + $0x138] sm:$0xf]
    %v819 = vld [vmem:[#allocation7 + $0x13c] sm:$0xf]
    %v820 = vld [vmem:[#allocation7 + $0x140] sm:$0xf]
    %v821 = vld [vmem:[#allocation7 + $0x144] sm:$0xf]
    %v822 = vld [vmem:[#allocation7 + $0x148] sm:$0xf]
    %v823 = vld [vmem:[#allocation7 + $0x14c] sm:$0xf]
    %v824 = vld [vmem:[#allocation7 + $0x150] sm:$0xf]
    %v825 = vld [vmem:[#allocation7 + $0x154] sm:$0xf]
    %v826 = vld [vmem:[#allocation7 + $0x158] sm:$0xf]
    %v827 = vld [vmem:[#allocation7 + $0x15c] sm:$0xf]
    %v828 = vld [vmem:[#allocation7 + $0x160] sm:$0xf]
    %v829 = vld [vmem:[#allocation7 + $0x164] sm:$0xf]
    %v830 = vld [vmem:[#allocation7 + $0x168] sm:$0xf]
    %v831 = vld [vmem:[#allocation7 + $0x16c] sm:$0xf]
    %v832 = vld [vmem:[#allocation7 + $0x170] sm:$0xf]
    %v833 = vld [vmem:[#allocation7 + $0x174] sm:$0x7]
    %v928 = vunpack.c.l.b16 %v740
    %v929 = vunpack.c.l.b16 %v741
    %v930 = vunpack.c.l.b16 %v742
    %v931 = vunpack.c.l.b16 %v743
    %v932 = vunpack.c.l.b16 %v744
    %v933 = vunpack.c.l.b16 %v745
    %v934 = vunpack.c.l.b16 %v746
    %v935 = vunpack.c.l.b16 %v747
    %v936 = vunpack.c.l.b16 %v748
    %v937 = vunpack.c.l.b16 %v749
    %v938 = vunpack.c.l.b16 %v750
    %v939 = vunpack.c.l.b16 %v751
    %v940 = vunpack.c.l.b16 %v752
    %v941 = vunpack.c.l.b16 %v753
    %v942 = vunpack.c.l.b16 %v754
    %v943 = vunpack.c.l.b16 %v755
    %v944 = vunpack.c.l.b16 %v756
    %v945 = vunpack.c.l.b16 %v757
    %v946 = vunpack.c.l.b16 %v758
    %v947 = vunpack.c.l.b16 %v759
    %v948 = vunpack.c.l.b16 %v760
    %v949 = vunpack.c.l.b16 %v761
    %v950 = vunpack.c.l.b16 %v762
    %v951 = vunpack.c.l.b16 %v763
    %v952 = vunpack.c.l.b16 %v764
    %v953 = vunpack.c.l.b16 %v765
    %v954 = vunpack.c.l.b16 %v766
    %v955 = vunpack.c.l.b16 %v767
    %v956 = vunpack.c.l.b16 %v768
    %v957 = vunpack.c.l.b16 %v769
    %v958 = vunpack.c.l.b16 %v770
    %v959 = vunpack.c.l.b16 %v771
    %v960 = vunpack.c.l.b16 %v772
    %v961 = vunpack.c.l.b16 %v773
    %v962 = vunpack.c.l.b16 %v774
    %v963 = vunpack.c.l.b16 %v775
    %v964 = vunpack.c.l.b16 %v776
    %v965 = vunpack.c.l.b16 %v777
    %v966 = vunpack.c.l.b16 %v778
    %v967 = vunpack.c.l.b16 %v779
    %v968 = vunpack.c.l.b16 %v780
    %v969 = vunpack.c.l.b16 %v781
    %v970 = vunpack.c.l.b16 %v782
    %v971 = vunpack.c.l.b16 %v783
    %v972 = vunpack.c.l.b16 %v784
    %v973 = vunpack.c.l.b16 %v785
    %v974 = vunpack.c.l.b16 %v786
    %v975 = vunpack.c.l.b16 %v787
    %v976 = vunpack.c.l.b16 %v788
    %v977 = vunpack.c.l.b16 %v789
    %v978 = vunpack.c.l.b16 %v790
    %v979 = vunpack.c.l.b16 %v791
    %v980 = vunpack.c.l.b16 %v792
    %v981 = vunpack.c.l.b16 %v793
    %v982 = vunpack.c.l.b16 %v794
    %v983 = vunpack.c.l.b16 %v795
    %v984 = vunpack.c.l.b16 %v796
    %v985 = vunpack.c.l.b16 %v797
    %v986 = vunpack.c.l.b16 %v798
    %v987 = vunpack.c.l.b16 %v799
    %v988 = vunpack.c.l.b16 %v800
    %v989 = vunpack.c.l.b16 %v801
    %v990 = vunpack.c.l.b16 %v802
    %v991 = vunpack.c.l.b16 %v803
    %v992 = vunpack.c.l.b16 %v804
    %v993 = vunpack.c.l.b16 %v805
    %v994 = vunpack.c.l.b16 %v806
    %v995 = vunpack.c.l.b16 %v807
    %v996 = vunpack.c.l.b16 %v808
    %v997 = vunpack.c.l.b16 %v809
    %v998 = vunpack.c.l.b16 %v810
    %v999 = vunpack.c.l.b16 %v811
    %v1000 = vunpack.c.l.b16 %v812
    %v1001 = vunpack.c.l.b16 %v813
    %v1002 = vunpack.c.l.b16 %v814
    %v1003 = vunpack.c.l.b16 %v815
    %v1004 = vunpack.c.l.b16 %v816
    %v1005 = vunpack.c.l.b16 %v817
    %v1006 = vunpack.c.l.b16 %v818
    %v1007 = vunpack.c.l.b16 %v819
    %v1008 = vunpack.c.l.b16 %v820
    %v1009 = vunpack.c.l.b16 %v821
    %v1010 = vunpack.c.l.b16 %v822
    %v1011 = vunpack.c.l.b16 %v823
    %v1012 = vunpack.c.l.b16 %v824
    %v1013 = vunpack.c.l.b16 %v825
    %v1014 = vunpack.c.l.b16 %v826
    %v1015 = vunpack.c.l.b16 %v827
    %v1016 = vunpack.c.l.b16 %v828
    %v1017 = vunpack.c.l.b16 %v829
    %v1018 = vunpack.c.l.b16 %v830
    %v1019 = vunpack.c.l.b16 %v831
    %v1020 = vunpack.c.l.b16 %v832
    %v1021 = vunpack.c.l.b16 %v833
    %v1022 = vpack.c.b16 %v929, %v928
    %v1023 = vpack.c.b16 %v931, %v930
    %v1024 = vpack.c.b16 %v933, %v932
    %v1025 = vpack.c.b16 %v935, %v934
    %v1026 = vpack.c.b16 %v937, %v936
    %v1027 = vpack.c.b16 %v939, %v938
    %v1028 = vpack.c.b16 %v941, %v940
    %v1029 = vpack.c.b16 %v943, %v942
    %v1030 = vpack.c.b16 %v945, %v944
    %v1031 = vpack.c.b16 %v947, %v946
    %v1032 = vpack.c.b16 %v949, %v948
    %v1033 = vpack.c.b16 %v951, %v950
    %v1034 = vpack.c.b16 %v953, %v952
    %v1035 = vpack.c.b16 %v955, %v954
    %v1036 = vpack.c.b16 %v957, %v956
    %v1037 = vpack.c.b16 %v959, %v958
    %v1038 = vpack.c.b16 %v961, %v960
    %v1039 = vpack.c.b16 %v963, %v962
    %v1040 = vpack.c.b16 %v965, %v964
    %v1041 = vpack.c.b16 %v967, %v966
    %v1042 = vpack.c.b16 %v969, %v968
    %v1043 = vpack.c.b16 %v971, %v970
    %v1044 = vpack.c.b16 %v973, %v972
    %v1045 = vpack.c.b16 %v975, %v974
    %v1046 = vpack.c.b16 %v977, %v976
    %v1047 = vpack.c.b16 %v979, %v978
    %v1048 = vpack.c.b16 %v981, %v980
    %v1049 = vpack.c.b16 %v983, %v982
    %v1050 = vpack.c.b16 %v985, %v984
    %v1051 = vpack.c.b16 %v987, %v986
    %v1052 = vpack.c.b16 %v989, %v988
    %v1053 = vpack.c.b16 %v991, %v990
    %v1054 = vpack.c.b16 %v993, %v992
    %v1055 = vpack.c.b16 %v995, %v994
    %v1056 = vpack.c.b16 %v997, %v996
    %v1057 = vpack.c.b16 %v999, %v998
    %v1058 = vpack.c.b16 %v1001, %v1000
    %v1059 = vpack.c.b16 %v1003, %v1002
    %v1060 = vpack.c.b16 %v1005, %v1004
    %v1061 = vpack.c.b16 %v1007, %v1006
    %v1062 = vpack.c.b16 %v1009, %v1008
    %v1063 = vpack.c.b16 %v1011, %v1010
    %v1064 = vpack.c.b16 %v1013, %v1012
    %v1065 = vpack.c.b16 %v1015, %v1014
    %v1066 = vpack.c.b16 %v1017, %v1016
    %v1067 = vpack.c.b16 %v1019, %v1018
    %v1068 = vpack.c.b16 %v1021, %v1020
    %v1116 = vsel %vm716, %v739, 0
    %vm1118 = vcmask 1046528
    %v1119 = vsel %vm349, 4294967295, 65535
    %v1120 = vsel %vm1118, %v1119, 0
    %v1122 = vand.u32 %v1068, %v1120
    %1124 = vmatprep.subr.bf16.mxu0 0
    %1125 = vmatpush1.bf16.msra.mxu0 %v1022
    %1126 = vmatprep.subr.bf16.mxu0 0
    %1127 = vmatpush1.bf16.msra.mxu0 %v1023
    %1128 = vmatprep.subr.bf16.mxu0 0
    %1129 = vmatpush1.bf16.msra.mxu0 %v1024
    %1130 = vmatprep.subr.bf16.mxu0 0
    %1131 = vmatpush1.bf16.msra.mxu0 %v1025
    %1132 = vmatprep.subr.bf16.mxu0 0
    %1133 = vmatpush1.bf16.msra.mxu0 %v1026
    %1134 = vmatprep.subr.bf16.mxu0 0
    %1135 = vmatpush1.bf16.msra.mxu0 %v1027
    %1136 = vmatprep.subr.bf16.mxu0 0
    %1137 = vmatpush1.bf16.msra.mxu0 %v1028
    %1138 = vmatprep.subr.bf16.mxu0 0
    %1139 = vmatpush1.bf16.msra.mxu0 %v1029
    %1140 = vmatprep.subr.bf16.mxu0 0
    %1141 = vmatpush1.bf16.msra.mxu0 %v1030
    %1142 = vmatprep.subr.bf16.mxu0 0
    %1143 = vmatpush1.bf16.msra.mxu0 %v1031
    %1144 = vmatprep.subr.bf16.mxu0 0
    %1145 = vmatpush1.bf16.msra.mxu0 %v1032
    %1146 = vmatprep.subr.bf16.mxu0 0
    %1147 = vmatpush1.bf16.msra.mxu0 %v1033
    %1148 = vmatprep.subr.bf16.mxu0 0
    %1149 = vmatpush1.bf16.msra.mxu0 %v1034
    %1150 = vmatprep.subr.bf16.mxu0 0
    %1151 = vmatpush1.bf16.msra.mxu0 %v1035
    %1152 = vmatprep.subr.bf16.mxu0 0
    %1153 = vmatpush1.bf16.msra.mxu0 %v1036
    %1154 = vmatprep.subr.bf16.mxu0 0
    %1155 = vmatpush1.bf16.msra.mxu0 %v1037
    %1156 = vmatprep.mubr.bf16.mxu0 %v735
    %1157 = vmatmul.mubr.bf16.gmra.mrb[0].mxu0 %v734
    %v1158 = vpop.f32.mrb[0].mxu0
    %v1159 = vadd.f32 0.0, %v1158
    %v1160 = vpop.f32.mrb[0].mxu0
    %v1161 = vpop.f32.mrb[0].mxu0
    %v1162 = vpop.f32.mrb[0].mxu0
    %1163 = vdwg.mxu0
    %1164 = vmatprep.subr.bf16.mxu0 0
    %1165 = vmatpush1.bf16.msra.mxu0 %v1038
    %1166 = vmatprep.subr.bf16.mxu0 0
    %1167 = vmatpush1.bf16.msra.mxu0 %v1039
    %1168 = vmatprep.subr.bf16.mxu0 0
    %1169 = vmatpush1.bf16.msra.mxu0 %v1040
    %1170 = vmatprep.subr.bf16.mxu0 0
    %1171 = vmatpush1.bf16.msra.mxu0 %v1041
    %1172 = vmatprep.subr.bf16.mxu0 0
    %1173 = vmatpush1.bf16.msra.mxu0 %v1042
    %1174 = vmatprep.subr.bf16.mxu0 0
    %1175 = vmatpush1.bf16.msra.mxu0 %v1043
    %1176 = vmatprep.subr.bf16.mxu0 0
    %1177 = vmatpush1.bf16.msra.mxu0 %v1044
    %1178 = vmatprep.subr.bf16.mxu0 0
    %1179 = vmatpush1.bf16.msra.mxu0 %v1045
    %1180 = vmatprep.subr.bf16.mxu0 0
    %1181 = vmatpush1.bf16.msra.mxu0 %v1046
    %1182 = vmatprep.subr.bf16.mxu0 0
    %1183 = vmatpush1.bf16.msra.mxu0 %v1047
    %1184 = vmatprep.subr.bf16.mxu0 0
    %1185 = vmatpush1.bf16.msra.mxu0 %v1048
    %1186 = vmatprep.subr.bf16.mxu0 0
    %1187 = vmatpush1.bf16.msra.mxu0 %v1049
    %1188 = vmatprep.subr.bf16.mxu0 0
    %1189 = vmatpush1.bf16.msra.mxu0 %v1050
    %1190 = vmatprep.subr.bf16.mxu0 0
    %1191 = vmatpush1.bf16.msra.mxu0 %v1051
    %1192 = vmatprep.subr.bf16.mxu0 0
    %1193 = vmatpush1.bf16.msra.mxu0 %v1052
    %1194 = vmatprep.subr.bf16.mxu0 0
    %1195 = vmatpush1.bf16.msra.mxu0 %v1053
    %1196 = vmatprep.mubr.bf16.mxu0 %v737
    %1197 = vmatmul.mubr.bf16.gmra.mrb[0].mxu0 %v736
    %v1198 = vpop.f32.mrb[0].mxu0
    %v1199 = vadd.f32 %v1159, %v1198
    %v1200 = vpop.f32.mrb[0].mxu0
    %v1201 = vpop.f32.mrb[0].mxu0
    %v1202 = vpop.f32.mrb[0].mxu0
    %1203 = vdwg.mxu0
    %1204 = vmatprep.subr.bf16.mxu0 0
    %1205 = vmatpush1.bf16.msra.mxu0 %v1054
    %1206 = vmatprep.subr.bf16.mxu0 0
    %1207 = vmatpush1.bf16.msra.mxu0 %v1055
    %1208 = vmatprep.subr.bf16.mxu0 0
    %1209 = vmatpush1.bf16.msra.mxu0 %v1056
    %1210 = vmatprep.subr.bf16.mxu0 0
    %1211 = vmatpush1.bf16.msra.mxu0 %v1057
    %1212 = vmatprep.subr.bf16.mxu0 0
    %1213 = vmatpush1.bf16.msra.mxu0 %v1058
    %1214 = vmatprep.subr.bf16.mxu0 0
    %1215 = vmatpush1.bf16.msra.mxu0 %v1059
    %1216 = vmatprep.subr.bf16.mxu0 0
    %1217 = vmatpush1.bf16.msra.mxu0 %v1060
    %1218 = vmatprep.subr.bf16.mxu0 0
    %1219 = vmatpush1.bf16.msra.mxu0 %v1061
    %1220 = vmatprep.subr.bf16.mxu0 0
    %1221 = vmatpush1.bf16.msra.mxu0 %v1062
    %1222 = vmatprep.subr.bf16.mxu0 0
    %1223 = vmatpush1.bf16.msra.mxu0 %v1063
    %1224 = vmatprep.subr.bf16.mxu0 0
    %1225 = vmatpush1.bf16.msra.mxu0 %v1064
    %1226 = vmatprep.subr.bf16.mxu0 0
    %1227 = vmatpush1.bf16.msra.mxu0 %v1065
    %1228 = vmatprep.subr.bf16.mxu0 0
    %1229 = vmatpush1.bf16.msra.mxu0 %v1066
    %1230 = vmatprep.subr.bf16.mxu0 0
    %1231 = vmatpush1.bf16.msra.mxu0 %v1067
    %1232 = vmatprep.subr.bf16.mxu0 0
    %1233 = vmatpush1.bf16.msra.mxu0 %v1122
    %1234 = vmatprep.subr.bf16.mxu0 0
    %1235 = vmatpush1.bf16.msra.mxu0 0
    %1236 = vmatprep.mubr.bf16.mxu0 %v1116
    %1237 = vmatmul.mubr.bf16.gmra.mrb[0].mxu0 %v738
    %v1238 = vpop.f32.mrb[0].mxu0
    %v1239 = vadd.f32 %v1199, %v1238
    %v1240 = vpop.f32.mrb[0].mxu0
    %v1241 = vpop.f32.mrb[0].mxu0
    %v1242 = vpop.f32.mrb[0].mxu0
    %1243 = vdwg.mxu0
    %1244 = vst [vmem:[#allocation8] sm:$0xff] %v1239
    // Predicated region
    $region30: #{tpu_custom_call.1} parent=1 // pred_check
      _
    $region31: #{tpu_custom_call.1} parent=1 // pred_check_branch
      %1246 = sbr.rel (0) target = $region33
    $region32: #{tpu_custom_call.1} parent=1 // pred_region
      %s1248 = ssub.s32 128, 128
      %1249 = vsyncadd [#allocation4], %s1248
      %s1251 = sshll.u32 [#allocation8], 4
      %s1252 = int_to_ptr.vmem [resolvable:$true] %s1251
      %1254 = dma.vmem_to_hbm [thread:$0]  %s1252, 128, %s4, [#allocation4]
    $region33: #{tpu_custom_call.1} parent=1 // pred_fallthru
      _
    // Predicated region
    $region34: #{tpu_custom_call.1} parent=1 // pred_check
      _
    $region35: #{tpu_custom_call.1} parent=1 // pred_check_branch
      %1256 = sbr.rel (0) target = $region37
    $region36: #{tpu_custom_call.1} parent=1 // pred_region
      %1257 = dma.done [#allocation4], 128
    $region37: #{tpu_custom_call.1} parent=1 // pred_fallthru
      _
    %1258 = vsyncpa [#allocation3], 1
    %1259 = vsyncpa [#allocation6], 1
    %1260 = vsyncpa [#allocation4], 1

</llo_original>
